<compile_context>
chip_gen: v7x
topology: tpu7x:2x2x1
jax: 0.10.0
libtpu: 0.0.40
codegen_flags: <defaults>
</compile_context>

<pallas_src>
import functools

import jax
import jax.numpy as jnp
from jax.experimental import pallas as pl
from jax.experimental.pallas import tpu as pltpu


def _mlp_kernel_T(num_hidden_layer, x_ref, *refs):
    """Fused MLP forward for one batch tile, activations transposed (batch on lanes).

    refs = (w_in, b_in, w_h0, b_h0, ..., w_out_col, b_out, o_ref)
      w_*      : [out, in]  (torch-native layout)
      b_*      : [out, 1]   (column, broadcasts across lanes)
      w_out_col: [H, 1], b_out: [1, 1]
      x_ref    : [F, batch_tile], o_ref : [1, batch_tile]
    """
    o_ref = refs[-1]
    p = refs[:-1]

    h = x_ref[...]                                   # [F, bt], batch on lanes

    # input_linear/relu + hidden_linear{i}/relu{i}
    for i in range(1 + num_hidden_layer):
        w = p[2 * i][...]                            # [out, in]
        b = p[2 * i + 1][...]                        # [out, 1] (fp32)
        h = jnp.dot(w, h, preferred_element_type=jnp.float32) + b
        h = jnp.maximum(h, 0.0).astype(w.dtype)      # keep activations in the weight dtype

    # output_linear (H -> 1): VPU multiply + sublane reduce instead of an N=1 MXU matmul.
    w_out = p[-2][...].astype(jnp.float32)           # [H, 1]
    b_out = p[-1][...]                               # [1, 1] (fp32)
    out = jnp.sum(h.astype(jnp.float32) * w_out, axis=0, keepdims=True) + b_out  # (1, bt)
    o_ref[...] = out.astype(o_ref.dtype)


def _padded_tile_bytes(shape, dtype):
    """Rough VMEM footprint of a 2-D array after (8, 128) layout padding."""
    if len(shape) == 1:
        shape = (1, shape[0])
    rows, cols = shape[-2], shape[-1]
    rows_p = -(-rows // 8) * 8
    cols_p = -(-cols // 128) * 128
    lead = 1
    for d in shape[:-2]:
        lead *= d
    return lead * rows_p * cols_p * jnp.dtype(dtype).itemsize


def struct2param_forward(features, params, *, batch_tile=256,
                         compute_dtype=jnp.float32):
    """features: [B, num_features] float32.
    params: list of (W [out, in], b [out]) in forward order (torch-native layout).
    compute_dtype: float32 everywhere; bfloat16 recommended on v6e/v7x (f32 accumulation).
    """
    B, F = features.shape
    num_hidden_layer = len(params) - 2
    H = params[0][0].shape[0]

    # Lane-aligned batch tile: multiple of 128, clamped to [128, 512].
    bt = max(128, (min(int(batch_tile), 512) // 128) * 128)
    B_pad = -(-B // bt) * bt
    grid = (B_pad // bt,)

    # Transpose features so batch lives on lanes; zero-pad the batch to a tile multiple.
    xT = jnp.transpose(features).astype(compute_dtype)          # [F, B]
    if B_pad != B:
        xT = jnp.pad(xT, ((0, 0), (0, B_pad - B)))

    flat_args = [xT]
    in_specs = [pl.BlockSpec((F, bt), lambda i: (i * 0, i))]     # features tile (batch on lanes)

    # All matmul layers except the last: weights [out, in], biases as [out, 1] columns.
    for (w, b) in params[:-1]:
        wt = w.astype(compute_dtype)
        bc = b.reshape(-1, 1).astype(jnp.float32)
        flat_args += [wt, bc]
        in_specs += [pl.BlockSpec(wt.shape, lambda i: (0, 0)),
                     pl.BlockSpec(bc.shape, lambda i: (0, 0))]

    # Final H -> 1 layer: weight as an [H, 1] column, scalar bias as [1, 1].
    w_out, b_out = params[-1]
    w_out_col = w_out.reshape(-1, 1).astype(compute_dtype)
    b_out_sc = b_out.reshape(1, 1).astype(jnp.float32)
    flat_args += [w_out_col, b_out_sc]
    in_specs += [pl.BlockSpec(w_out_col.shape, lambda i: (0, 0)),
                 pl.BlockSpec((1, 1), lambda i: (0, 0))]

    # Explicit VMEM budget (double-buffered inputs/outputs + activation headroom),
    # clamped to stay under v7x's 64 MiB physical VMEM.
    resident = 2 * _padded_tile_bytes((F, bt), compute_dtype)
    resident += 2 * _padded_tile_bytes((1, bt), jnp.float32)
    for a in flat_args[1:]:
        resident += 2 * _padded_tile_bytes(a.shape, a.dtype)
    resident += 4 * _padded_tile_bytes((H, bt), jnp.float32)
    vmem_limit = int(min(max(resident + (8 << 20), 32 << 20), 48 << 20))

    kernel = functools.partial(_mlp_kernel_T, num_hidden_layer)

    out = pl.pallas_call(
        kernel,
        out_shape=jax.ShapeDtypeStruct((1, B_pad), jnp.float32),
        grid=grid,
        in_specs=in_specs,
        out_specs=pl.BlockSpec((1, bt), lambda i: (0, i)),       # lane-dense output row
        compiler_params=pltpu.CompilerParams(
            dimension_semantics=("parallel",),
            vmem_limit_bytes=vmem_limit,
        ),
    )(*flat_args)

    out = out[0, :B]
    # torch: self.ff_layers(features).squeeze()  -> [B]; B == 1 collapses to a scalar.
    if B == 1:
        out = out[0]
    return out


def init_struct2param_params(key, num_features, num_hidden_layer, hidden_layer_width):
    """torch.nn.Linear default init: U(-1/sqrt(fan_in), 1/sqrt(fan_in)).
    Returns list of (W [out, in], b [out]) in forward order (torch-native layout)."""
    dims = [(hidden_layer_width, num_features)]
    dims += [(hidden_layer_width, hidden_layer_width)] * num_hidden_layer
    dims += [(1, hidden_layer_width)]

    params = []
    for (fan_out, fan_in) in dims:
        key, kw, kb = jax.random.split(key, 3)
        bound = 1.0 / jnp.sqrt(jnp.float32(fan_in))
        w = jax.random.uniform(kw, (fan_out, fan_in), jnp.float32, -bound, bound)
        b = jax.random.uniform(kb, (fan_out,), jnp.float32, -bound, bound)
        params.append((w, b))
    return params


def struct2param_reference(features, params):
    """Plain-JAX reference (torch-layout weights)."""
    h = features
    for i, (w, b) in enumerate(params):
        h = h @ w.T + b
        if i < len(params) - 1:
            h = jnp.maximum(h, 0.0)
    return jnp.squeeze(h)


if __name__ == "__main__":
    B, num_features = 512, 32
    num_hidden_layer = 1
    hidden_layer_width = 64

    key = jax.random.PRNGKey(0)
    key, kx = jax.random.split(key)
    features = jax.random.normal(kx, (B, num_features), dtype=jnp.float32)
    params = init_struct2param_params(key, num_features, num_hidden_layer,
                                      hidden_layer_width)

    # fp32 path: batch_tile=256 -> 2 grid steps (both TCs get work on v7x).
    out = jax.block_until_ready(
        struct2param_forward(features, params, batch_tile=256))
    ref = struct2param_reference(features, params)
    assert out.shape == (B,), out.shape
    assert jnp.allclose(out, ref, atol=1e-4, rtol=1e-4)

    # Ragged batch (exercises the zero-padding / slicing path).
    B2 = 200
    out2 = jax.block_until_ready(
        struct2param_forward(features[:B2], params, batch_tile=256))
    ref2 = struct2param_reference(features[:B2], params)
    assert out2.shape == (B2,), out2.shape
    assert jnp.allclose(out2, ref2, atol=1e-4, rtol=1e-4)

    # bf16 compute path (v6e / v7x fast path; f32 accumulation on the MXU).
    out_bf16 = jax.block_until_ready(
        struct2param_forward(features, params, batch_tile=256,
                             compute_dtype=jnp.bfloat16))
    assert out_bf16.shape == (B,)
    assert jnp.allclose(out_bf16, ref, atol=5e-2, rtol=5e-2)

    print("KERNEL_OK")
</pallas_src>

<mosaic_0001>
module attributes {stable_mosaic.version = 11 : i64} {
  func.func @_mlp_kernel_T(%arg0: i32, %arg1: memref<32x256xf32, #tpu.memory_space<vmem>>, %arg2: memref<64x32xf32, #tpu.memory_space<vmem>>, %arg3: memref<64x1xf32, #tpu.memory_space<vmem>>, %arg4: memref<64x64xf32, #tpu.memory_space<vmem>>, %arg5: memref<64x1xf32, #tpu.memory_space<vmem>>, %arg6: memref<64x1xf32, #tpu.memory_space<vmem>>, %arg7: memref<1x1xf32, #tpu.memory_space<vmem>>, %arg8: memref<1x256xf32, #tpu.memory_space<vmem>>) attributes {dimension_semantics = [#tpu.dimension_semantics<parallel>], iteration_bounds = array<i64: 2>, scalar_prefetch = 0 : i64, scratch_operands = 0 : i64, tpu.core_type = #tpu.core_type<tc>, window_params = [{transform_indices = @transform_0, window_bounds = array<i64: 32, 256>}, {pipeline_mode = #tpu.pipeline_mode<synchronous>, transform_indices = @transform_1, window_bounds = array<i64: 64, 32>}, {pipeline_mode = #tpu.pipeline_mode<synchronous>, transform_indices = @transform_2, window_bounds = array<i64: 64, 1>}, {pipeline_mode = #tpu.pipeline_mode<synchronous>, transform_indices = @transform_3, window_bounds = array<i64: 64, 64>}, {pipeline_mode = #tpu.pipeline_mode<synchronous>, transform_indices = @transform_4, window_bounds = array<i64: 64, 1>}, {pipeline_mode = #tpu.pipeline_mode<synchronous>, transform_indices = @transform_5, window_bounds = array<i64: 64, 1>}, {pipeline_mode = #tpu.pipeline_mode<synchronous>, transform_indices = @transform_6, window_bounds = array<i64: 1, 1>}, {transform_indices = @transform_7, window_bounds = array<i64: 1, 256>}]} {
    %c0 = arith.constant 0 : index
    %c0_0 = arith.constant 0 : index
    %0 = vector.load %arg1[%c0, %c0_0] : memref<32x256xf32, #tpu.memory_space<vmem>>, vector<32x256xf32>
    %c0_1 = arith.constant 0 : index
    %c0_2 = arith.constant 0 : index
    %1 = vector.load %arg2[%c0_1, %c0_2] : memref<64x32xf32, #tpu.memory_space<vmem>>, vector<64x32xf32>
    %c0_3 = arith.constant 0 : index
    %c0_4 = arith.constant 0 : index
    %2 = vector.load %arg3[%c0_3, %c0_4] : memref<64x1xf32, #tpu.memory_space<vmem>>, vector<64x1xf32>
    %cst = arith.constant dense<0.000000e+00> : vector<64x256xf32>
    %3 = tpu.matmul %1, %0, %cst {dimension_numbers = #tpu.dot_dimension_numbers<[1], [0], [0], [1], [0, 0, 1, 1], [], []>} : vector<64x32xf32>, vector<32x256xf32>, vector<64x256xf32> -> vector<64x256xf32>
    %4 = vector.broadcast %2 : vector<64x1xf32> to vector<64x256xf32>
    %5 = arith.addf %3, %4 : vector<64x256xf32>
    %cst_5 = arith.constant 0.000000e+00 : f32
    %6 = vector.broadcast %cst_5 : f32 to vector<64x256xf32>
    %7 = arith.maximumf %5, %6 : vector<64x256xf32>
    %c0_6 = arith.constant 0 : index
    %c0_7 = arith.constant 0 : index
    %8 = vector.load %arg4[%c0_6, %c0_7] : memref<64x64xf32, #tpu.memory_space<vmem>>, vector<64x64xf32>
    %c0_8 = arith.constant 0 : index
    %c0_9 = arith.constant 0 : index
    %9 = vector.load %arg5[%c0_8, %c0_9] : memref<64x1xf32, #tpu.memory_space<vmem>>, vector<64x1xf32>
    %cst_10 = arith.constant dense<0.000000e+00> : vector<64x256xf32>
    %10 = tpu.matmul %8, %7, %cst_10 {dimension_numbers = #tpu.dot_dimension_numbers<[1], [0], [0], [1], [0, 0, 1, 1], [], []>} : vector<64x64xf32>, vector<64x256xf32>, vector<64x256xf32> -> vector<64x256xf32>
    %11 = vector.broadcast %9 : vector<64x1xf32> to vector<64x256xf32>
    %12 = arith.addf %10, %11 : vector<64x256xf32>
    %cst_11 = arith.constant 0.000000e+00 : f32
    %13 = vector.broadcast %cst_11 : f32 to vector<64x256xf32>
    %14 = arith.maximumf %12, %13 : vector<64x256xf32>
    %c0_12 = arith.constant 0 : index
    %c0_13 = arith.constant 0 : index
    %15 = vector.load %arg6[%c0_12, %c0_13] : memref<64x1xf32, #tpu.memory_space<vmem>>, vector<64x1xf32>
    %c0_14 = arith.constant 0 : index
    %c0_15 = arith.constant 0 : index
    %16 = vector.load %arg7[%c0_14, %c0_15] : memref<1x1xf32, #tpu.memory_space<vmem>>, vector<1x1xf32>
    %17 = vector.broadcast %15 : vector<64x1xf32> to vector<64x256xf32>
    %18 = arith.mulf %14, %17 : vector<64x256xf32>
    %cst_16 = arith.constant dense<0.000000e+00> : vector<256xf32>
    %19 = vector.multi_reduction <add>, %18, %cst_16 [0] : vector<64x256xf32> to vector<256xf32>
    %20 = vector.shape_cast %19 : vector<256xf32> to vector<1x256xf32>
    %21 = vector.broadcast %16 : vector<1x1xf32> to vector<1x256xf32>
    %22 = arith.addf %20, %21 : vector<1x256xf32>
    %c0_17 = arith.constant 0 : index
    %c0_18 = arith.constant 0 : index
    %23 = vector.load %arg8[%c0_17, %c0_18] : memref<1x256xf32, #tpu.memory_space<vmem>>, vector<1x256xf32>
    tpu.vector_store %arg8[%c0_17, %c0_18], %22 {strides = array<i32>} : memref<1x256xf32, #tpu.memory_space<vmem>>, vector<1x256xf32>,
    return
  }
  func.func @transform_0(%arg0: i32) -> (i32, i32) {
    %c0_i32 = arith.constant 0 : i32
    %0 = arith.muli %arg0, %c0_i32 : i32
    %c0_i32_0 = arith.constant 0 : i32
    return %0, %arg0 : i32, i32
  }
  func.func @transform_1(%arg0: i32) -> (i32, i32) {
    %c0_i32 = arith.constant 0 : i32
    %c0_i32_0 = arith.constant 0 : i32
    %c0_i32_1 = arith.constant 0 : i32
    return %c0_i32, %c0_i32_0 : i32, i32
  }
  func.func @transform_2(%arg0: i32) -> (i32, i32) {
    %c0_i32 = arith.constant 0 : i32
    %c0_i32_0 = arith.constant 0 : i32
    %c0_i32_1 = arith.constant 0 : i32
    return %c0_i32, %c0_i32_0 : i32, i32
  }
  func.func @transform_3(%arg0: i32) -> (i32, i32) {
    %c0_i32 = arith.constant 0 : i32
    %c0_i32_0 = arith.constant 0 : i32
    %c0_i32_1 = arith.constant 0 : i32
    return %c0_i32, %c0_i32_0 : i32, i32
  }
  func.func @transform_4(%arg0: i32) -> (i32, i32) {
    %c0_i32 = arith.constant 0 : i32
    %c0_i32_0 = arith.constant 0 : i32
    %c0_i32_1 = arith.constant 0 : i32
    return %c0_i32, %c0_i32_0 : i32, i32
  }
  func.func @transform_5(%arg0: i32) -> (i32, i32) {
    %c0_i32 = arith.constant 0 : i32
    %c0_i32_0 = arith.constant 0 : i32
    %c0_i32_1 = arith.constant 0 : i32
    return %c0_i32, %c0_i32_0 : i32, i32
  }
  func.func @transform_6(%arg0: i32) -> (i32, i32) {
    %c0_i32 = arith.constant 0 : i32
    %c0_i32_0 = arith.constant 0 : i32
    %c0_i32_1 = arith.constant 0 : i32
    return %c0_i32, %c0_i32_0 : i32, i32
  }
  func.func @transform_7(%arg0: i32) -> (i32, i32) {
    %c0_i32 = arith.constant 0 : i32
    %c0_i32_0 = arith.constant 0 : i32
    return %c0_i32, %arg0 : i32, i32
  }
}

</mosaic_0001>

<llo_original>
// kernel: tpu_custom_call.1
$region0: #{tpu_custom_call.1}
  #allocation0 [shape = 'u32[]', space=smem, size = 0x4, offset = 0x4, fixed_abs, tag = 'smem constant byte address 0x4 - core index']
  #allocation1 [shape = 'u32[144,128]{1,0:T(1,128)}', space=vmem, size = 0x12000, scoped, tag = 'internal scratch']
  #allocation2 [shape = 'f32[1,1]{1,0:T(1,128)S(1)}', space=vmem, size = 0x200, scoped, tag = 'scoped memory for tpu_custom_call.1']
  %s0 = inlined_call_operand.vmem [shape: f32[32,512], index: 0, kind: input, shape index: {}]
  %s1 = inlined_call_operand.vmem [shape: f32[64,32], index: 1, kind: input, shape index: {}]
  %s2 = inlined_call_operand.vmem [shape: f32[64,1], index: 2, kind: input, shape index: {}]
  %s3 = inlined_call_operand.vmem [shape: f32[64,64], index: 3, kind: input, shape index: {}]
  %s4 = inlined_call_operand.vmem [shape: f32[64,1], index: 4, kind: input, shape index: {}]
  %s5 = inlined_call_operand.vmem [shape: f32[64,1], index: 5, kind: input, shape index: {}]
  %s6 = inlined_call_operand.<no memory space> [shape: f32[1,1], index: 6, kind: input, shape index: {}]
  %s7 = inlined_call_operand.hbm [shape: f32[1,512], index: 7, kind: output, shape index: {}]
  %s8 = sld [smem:[#allocation0]]
  $region84: #{tpu_custom_call.1} parent=0
    _
  %s10 = ssub.s32 1, %s8
  %s11 = scalar_select 0, %s10, %s8
  %v12 = vstv %s6
  %13 = vst [vmem:[#allocation2] sm:$0x1] %v12
  $region1: #{tpu_custom_call.1} parent=0
    #allocation3 [shape = 'u8[65536]{0}', space=vmem, size = 0x10000, scoped, tag = 'input window, operand 0']
    #allocation4 [shape = 'u8[2048]{0}', space=vmem, size = 0x800, scoped, tag = 'output window, operand 0']
    #allocation5 [shape = 's32[2]{0}', space=sflag, size = 0x8, scoped, tag = 'scoped memory for tpu_custom_call.1']
    %14 = vsyncpa [#allocation5], 0
    %s15 = scalar_lea.sflag [#allocation5], 1
    %16 = vsyncpa %s15, 0
    loop: start=0, step=1, limit=4
    $region2: #{tpu_custom_call.1} parent=1 // loop_pre_header
      _
    $region3: #{tpu_custom_call.1} parent=1 // loop_header
      %s18 = sphi 0, %s22
      %p19 = scmp.ge.s32.totalorder %s18, 4
      %s28 = sphi 0, %s30
      %s31 = sphi 0, %s28
      %s32 = sphi 0, %s31
      %s48 = sphi 0, %s32
      %s52 = sphi 0, %s52
      %s54 = sphi 0, %s52
      %s55 = sphi 0, %s54
      %s69 = sphi 0, %s55
      %s73 = sphi 0, %s73
      %s75 = sphi 0, %s73
      %s76 = sphi 0, %s75
      %s90 = sphi 0, %s76
      %s94 = sphi 0, %s94
      %s96 = sphi 0, %s94
      %s97 = sphi 0, %s96
      %s111 = sphi 0, %s97
      %s115 = sphi 0, %s115
      %s117 = sphi 0, %s115
      %s118 = sphi 0, %s117
      %s132 = sphi 0, %s118
      %s136 = sphi 0, %s136
      %s138 = sphi 0, %s136
      %s139 = sphi 0, %s138
      %s153 = sphi 0, %s139
      %s157 = sphi 0, %s157
      %s159 = sphi 0, %s157
      %s160 = sphi 0, %s159
      %s174 = sphi 0, %s160
      %s180 = sphi 0, %s182
      %s183 = sphi 0, %s180
      %s184 = sphi 0, %s183
      %s200 = sphi 0, %s184
    $region4: #{tpu_custom_call.1} parent=1 // loop_header_branch
      %21 = sbr.rel (%p19) target = $region8
    $region5: #{tpu_custom_call.1} parent=1 // loop_body
      %s23 = ssub.s32 %s18, 1
      %s24 = ssub.s32 %s18, 2
      %s25 = sadd.s32 %s18, 1
      %s26 = ssub.s32 %s18, %s25
      %p27 = scmp.eq.s32.totalorder %s26, 0
      %s29 = sadd.s32 %s28, 1
      %s30 = scalar_select %p27, %s28, %s29
      %p33 = pneg %p27
      %p34 = scmp.eq.s32.totalorder %s18, 1
      %p35 = por %p33, %p34
      %p36 = scmp.ne.s32.totalorder %s28, %s31
      %p37 = scmp.eq.s32.totalorder %s18, 0
      %p38 = por %p36, %p37
      %p39 = scmp.ne.s32.totalorder %s28, %s31
      %p40 = scmp.eq.s32.totalorder %s23, 1
      %p41 = por %p39, %p40
      %p42 = scmp.ne.s32.totalorder %s31, %s32
      %p43 = scmp.eq.s32.totalorder %s23, 0
      %p44 = por %p42, %p43
      %p45 = scmp.ne.s32.totalorder %s31, %s32
      %p46 = scmp.eq.s32.totalorder %s24, 1
      %p47 = por %p45, %p46
      %p49 = scmp.ne.s32.totalorder %s32, %s48
      %p50 = scmp.eq.s32.totalorder %s24, 0
      %p51 = por %p49, %p50
      %s53 = sadd.s32 %s52, 1
      %p56 = scmp.eq.s32.totalorder %s18, 1
      %p57 = scmp.ne.s32.totalorder %s52, %s54
      %p58 = scmp.eq.s32.totalorder %s18, 0
      %p59 = por %p57, %p58
      %p60 = scmp.ne.s32.totalorder %s52, %s54
      %p61 = scmp.eq.s32.totalorder %s23, 1
      %p62 = por %p60, %p61
      %p63 = scmp.ne.s32.totalorder %s54, %s55
      %p64 = scmp.eq.s32.totalorder %s23, 0
      %p65 = por %p63, %p64
      %p66 = scmp.ne.s32.totalorder %s54, %s55
      %p67 = scmp.eq.s32.totalorder %s24, 1
      %p68 = por %p66, %p67
      %p70 = scmp.ne.s32.totalorder %s55, %s69
      %p71 = scmp.eq.s32.totalorder %s24, 0
      %p72 = por %p70, %p71
      %s74 = sadd.s32 %s73, 1
      %p77 = scmp.eq.s32.totalorder %s18, 1
      %p78 = scmp.ne.s32.totalorder %s73, %s75
      %p79 = scmp.eq.s32.totalorder %s18, 0
      %p80 = por %p78, %p79
      %p81 = scmp.ne.s32.totalorder %s73, %s75
      %p82 = scmp.eq.s32.totalorder %s23, 1
      %p83 = por %p81, %p82
      %p84 = scmp.ne.s32.totalorder %s75, %s76
      %p85 = scmp.eq.s32.totalorder %s23, 0
      %p86 = por %p84, %p85
      %p87 = scmp.ne.s32.totalorder %s75, %s76
      %p88 = scmp.eq.s32.totalorder %s24, 1
      %p89 = por %p87, %p88
      %p91 = scmp.ne.s32.totalorder %s76, %s90
      %p92 = scmp.eq.s32.totalorder %s24, 0
      %p93 = por %p91, %p92
      %s95 = sadd.s32 %s94, 1
      %p98 = scmp.eq.s32.totalorder %s18, 1
      %p99 = scmp.ne.s32.totalorder %s94, %s96
      %p100 = scmp.eq.s32.totalorder %s18, 0
      %p101 = por %p99, %p100
      %p102 = scmp.ne.s32.totalorder %s94, %s96
      %p103 = scmp.eq.s32.totalorder %s23, 1
      %p104 = por %p102, %p103
      %p105 = scmp.ne.s32.totalorder %s96, %s97
      %p106 = scmp.eq.s32.totalorder %s23, 0
      %p107 = por %p105, %p106
      %p108 = scmp.ne.s32.totalorder %s96, %s97
      %p109 = scmp.eq.s32.totalorder %s24, 1
      %p110 = por %p108, %p109
      %p112 = scmp.ne.s32.totalorder %s97, %s111
      %p113 = scmp.eq.s32.totalorder %s24, 0
      %p114 = por %p112, %p113
      %s116 = sadd.s32 %s115, 1
      %p119 = scmp.eq.s32.totalorder %s18, 1
      %p120 = scmp.ne.s32.totalorder %s115, %s117
      %p121 = scmp.eq.s32.totalorder %s18, 0
      %p122 = por %p120, %p121
      %p123 = scmp.ne.s32.totalorder %s115, %s117
      %p124 = scmp.eq.s32.totalorder %s23, 1
      %p125 = por %p123, %p124
      %p126 = scmp.ne.s32.totalorder %s117, %s118
      %p127 = scmp.eq.s32.totalorder %s23, 0
      %p128 = por %p126, %p127
      %p129 = scmp.ne.s32.totalorder %s117, %s118
      %p130 = scmp.eq.s32.totalorder %s24, 1
      %p131 = por %p129, %p130
      %p133 = scmp.ne.s32.totalorder %s118, %s132
      %p134 = scmp.eq.s32.totalorder %s24, 0
      %p135 = por %p133, %p134
      %s137 = sadd.s32 %s136, 1
      %p140 = scmp.eq.s32.totalorder %s18, 1
      %p141 = scmp.ne.s32.totalorder %s136, %s138
      %p142 = scmp.eq.s32.totalorder %s18, 0
      %p143 = por %p141, %p142
      %p144 = scmp.ne.s32.totalorder %s136, %s138
      %p145 = scmp.eq.s32.totalorder %s23, 1
      %p146 = por %p144, %p145
      %p147 = scmp.ne.s32.totalorder %s138, %s139
      %p148 = scmp.eq.s32.totalorder %s23, 0
      %p149 = por %p147, %p148
      %p150 = scmp.ne.s32.totalorder %s138, %s139
      %p151 = scmp.eq.s32.totalorder %s24, 1
      %p152 = por %p150, %p151
      %p154 = scmp.ne.s32.totalorder %s139, %s153
      %p155 = scmp.eq.s32.totalorder %s24, 0
      %p156 = por %p154, %p155
      %s158 = sadd.s32 %s157, 1
      %p161 = scmp.eq.s32.totalorder %s18, 1
      %p162 = scmp.ne.s32.totalorder %s157, %s159
      %p163 = scmp.eq.s32.totalorder %s18, 0
      %p164 = por %p162, %p163
      %p165 = scmp.ne.s32.totalorder %s157, %s159
      %p166 = scmp.eq.s32.totalorder %s23, 1
      %p167 = por %p165, %p166
      %p168 = scmp.ne.s32.totalorder %s159, %s160
      %p169 = scmp.eq.s32.totalorder %s23, 0
      %p170 = por %p168, %p169
      %p171 = scmp.ne.s32.totalorder %s159, %s160
      %p172 = scmp.eq.s32.totalorder %s24, 1
      %p173 = por %p171, %p172
      %p175 = scmp.ne.s32.totalorder %s160, %s174
      %p176 = scmp.eq.s32.totalorder %s24, 0
      %p177 = por %p175, %p176
      %s178 = ssub.s32 %s18, %s25
      %p179 = scmp.eq.s32.totalorder %s178, 0
      %s181 = sadd.s32 %s180, 1
      %s182 = scalar_select %p179, %s180, %s181
      %p185 = pneg %p179
      %p186 = scmp.eq.s32.totalorder %s18, 1
      %p187 = por %p185, %p186
      %p188 = scmp.ne.s32.totalorder %s180, %s183
      %p189 = scmp.eq.s32.totalorder %s18, 0
      %p190 = por %p188, %p189
      %p191 = scmp.ne.s32.totalorder %s180, %s183
      %p192 = scmp.eq.s32.totalorder %s23, 1
      %p193 = por %p191, %p192
      %p194 = scmp.ne.s32.totalorder %s183, %s184
      %p195 = scmp.eq.s32.totalorder %s23, 0
      %p196 = por %p194, %p195
      %p197 = scmp.ne.s32.totalorder %s183, %s184
      %p198 = scmp.eq.s32.totalorder %s24, 1
      %p199 = por %p197, %p198
      %p201 = scmp.ne.s32.totalorder %s184, %s200
      %p202 = scmp.eq.s32.totalorder %s24, 0
      %p203 = por %p201, %p202
      %p204 = scmp.le.s32.totalorder 1, %s18
      %p205 = scmp.lt.s32.totalorder %s18, 3
      %p206 = pnand %p204, %p205
      %p207 = pneg %p206
      // Predicated region
      $region9: #{tpu_custom_call.1} parent=5 // pred_check
        _
      $region10: #{tpu_custom_call.1} parent=5 // pred_check_branch
        %209 = sbr.rel (%p206) target = $region12
      $region11: #{tpu_custom_call.1} parent=5 // pred_region
        %s210 = ssub.s32 %s18, 1
        // Predicated region
        $region13: #{tpu_custom_call.1} parent=11 // pred_check
          %p211 = pneg %p65
        $region14: #{tpu_custom_call.1} parent=11 // pred_check_branch
          %213 = sbr.rel (%p211) target = $region16
        $region15: #{tpu_custom_call.1} parent=11 // pred_region
          _
        $region16: #{tpu_custom_call.1} parent=11 // pred_fallthru
          _
        // Predicated region
        $region17: #{tpu_custom_call.1} parent=11 // pred_check
          %p214 = pneg %p86
        $region18: #{tpu_custom_call.1} parent=11 // pred_check_branch
          %216 = sbr.rel (%p214) target = $region20
        $region19: #{tpu_custom_call.1} parent=11 // pred_region
          _
        $region20: #{tpu_custom_call.1} parent=11 // pred_fallthru
          _
        // Predicated region
        $region21: #{tpu_custom_call.1} parent=11 // pred_check
          %p217 = pneg %p107
        $region22: #{tpu_custom_call.1} parent=11 // pred_check_branch
          %219 = sbr.rel (%p217) target = $region24
        $region23: #{tpu_custom_call.1} parent=11 // pred_region
          _
        $region24: #{tpu_custom_call.1} parent=11 // pred_fallthru
          _
        // Predicated region
        $region25: #{tpu_custom_call.1} parent=11 // pred_check
          %p220 = pneg %p128
        $region26: #{tpu_custom_call.1} parent=11 // pred_check_branch
          %222 = sbr.rel (%p220) target = $region28
        $region27: #{tpu_custom_call.1} parent=11 // pred_region
          _
        $region28: #{tpu_custom_call.1} parent=11 // pred_fallthru
          _
        // Predicated region
        $region29: #{tpu_custom_call.1} parent=11 // pred_check
          %p223 = pneg %p149
        $region30: #{tpu_custom_call.1} parent=11 // pred_check_branch
          %225 = sbr.rel (%p223) target = $region32
        $region31: #{tpu_custom_call.1} parent=11 // pred_region
          _
        $region32: #{tpu_custom_call.1} parent=11 // pred_fallthru
          _
        // Predicated region
        $region33: #{tpu_custom_call.1} parent=11 // pred_check
          %p226 = pneg %p170
        $region34: #{tpu_custom_call.1} parent=11 // pred_check_branch
          %228 = sbr.rel (%p226) target = $region36
        $region35: #{tpu_custom_call.1} parent=11 // pred_region
          _
        $region36: #{tpu_custom_call.1} parent=11 // pred_fallthru
          _
      $region12: #{tpu_custom_call.1} parent=5 // pred_fallthru
        _
      %p229 = scmp.lt.s32.totalorder %s18, 2
      // Predicated region
      $region37: #{tpu_custom_call.1} parent=5 // pred_check
        %p230 = pneg %p229
      $region38: #{tpu_custom_call.1} parent=5 // pred_check_branch
        %232 = sbr.rel (%p230) target = $region40
      $region39: #{tpu_custom_call.1} parent=5 // pred_region
        // Predicated region
        $region41: #{tpu_custom_call.1} parent=39 // pred_check
          %p233 = pneg %p38
        $region42: #{tpu_custom_call.1} parent=39 // pred_check_branch
          %235 = sbr.rel (%p233) target = $region44
        $region43: #{tpu_custom_call.1} parent=39 // pred_region
          %s236 = sand.u32 %s28, 1
          %s237 = sand.u32 %s28, 1
          %s238 = smul.addr %s237, 64
          %s239 = scalar_lea.vmem [#allocation3], %s238
          %s240 = smul.u32 2, %s18
          %s241 = smul.addr %s240, 8
          %s242 = scalar_lea.vmem %s0, %s241
          // Predicated region
          $region45: #{tpu_custom_call.1} parent=43 // pred_check
            _
          $region46: #{tpu_custom_call.1} parent=43 // pred_check_branch
            %244 = sbr.rel (0) target = $region48
          $region47: #{tpu_custom_call.1} parent=43 // pred_region
            // Predicated region
            $region49: #{tpu_custom_call.1} parent=47 // pred_check
              _
            $region50: #{tpu_custom_call.1} parent=47 // pred_check_branch
              %246 = sbr.rel (0) target = $region52
            $region51: #{tpu_custom_call.1} parent=47 // pred_region
              loop: start=0, step=1, limit=1
              $region53: #{tpu_custom_call.1} parent=51 // loop_pre_header
                _
              $region54: #{tpu_custom_call.1} parent=51 // loop_header
                %s248 = sphi 0, %s252
                %p249 = scmp.ge.s32.totalorder %s248, 1
                %s253 = sphi %s242, %s242
                %s254 = sphi %s239, %s239
              $region55: #{tpu_custom_call.1} parent=51 // loop_header_branch
                %251 = sbr.rel (%p249) target = $region59
              $region56: #{tpu_custom_call.1} parent=51 // loop_body
                %v255 = vld [vmem:[%s253] sm:$0xff]
                %256 = vst [vmem:[%s254] sm:$0xff] %v255
                %v257 = vld [vmem:[%s253 + $0x8] sm:$0xff]
                %258 = vst [vmem:[%s254 + $0x8] sm:$0xff] %v257
                %v259 = vld [vmem:[%s253 + $0x20] sm:$0xff]
                %260 = vst [vmem:[%s254 + $0x10] sm:$0xff] %v259
                %v261 = vld [vmem:[%s253 + $0x28] sm:$0xff]
                %262 = vst [vmem:[%s254 + $0x18] sm:$0xff] %v261
                %v263 = vld [vmem:[%s253 + $0x40] sm:$0xff]
                %264 = vst [vmem:[%s254 + $0x20] sm:$0xff] %v263
                %v265 = vld [vmem:[%s253 + $0x48] sm:$0xff]
                %266 = vst [vmem:[%s254 + $0x28] sm:$0xff] %v265
                %v267 = vld [vmem:[%s253 + $0x60] sm:$0xff]
                %268 = vst [vmem:[%s254 + $0x30] sm:$0xff] %v267
                %v269 = vld [vmem:[%s253 + $0x68] sm:$0xff]
                %270 = vst [vmem:[%s254 + $0x38] sm:$0xff] %v269
              $region57: #{tpu_custom_call.1} parent=51 // loop_footer
                %s252 = sadd.s32 1, %s248
              $region58: #{tpu_custom_call.1} parent=51 // loop_footer_branch
                %247 = sbr.rel target = $region54
              $region59: #{tpu_custom_call.1} parent=51 // loop_exit
                _
            $region52: #{tpu_custom_call.1} parent=47 // pred_fallthru
              _
            // Predicated region
            $region60: #{tpu_custom_call.1} parent=47 // pred_check
              _
            $region61: #{tpu_custom_call.1} parent=47 // pred_check_branch
              %272 = sbr.rel target = $region63
            $region62: #{tpu_custom_call.1} parent=47 // pred_region
              _
            $region63: #{tpu_custom_call.1} parent=47 // pred_fallthru
              _
          $region48: #{tpu_custom_call.1} parent=43 // pred_fallthru
            _
          %273 = vnop
        $region44: #{tpu_custom_call.1} parent=39 // pred_fallthru
          _
      $region40: #{tpu_custom_call.1} parent=5 // pred_fallthru
        _
      %p274 = scmp.le.s32.totalorder 1, %s18
      %p275 = scmp.lt.s32.totalorder %s18, 3
      %p276 = pnand %p274, %p275
      %p277 = pneg %p276
      // Predicated region
      $region64: #{tpu_custom_call.1} parent=5 // pred_check
        _
      $region65: #{tpu_custom_call.1} parent=5 // pred_check_branch
        %279 = sbr.rel (%p276) target = $region67
      $region66: #{tpu_custom_call.1} parent=5 // pred_region
        %s280 = ssub.s32 %s18, 1
        %s281 = sand.u32 %s31, 1
        %s282 = sand.u32 %s31, 1
        %s283 = smul.addr %s282, 64
        %s284 = scalar_lea.vmem [#allocation3], %s283
        // Predicated region
        $region68: #{tpu_custom_call.1} parent=66 // pred_check
          %p285 = pneg %p44
        $region69: #{tpu_custom_call.1} parent=66 // pred_check_branch
          %287 = sbr.rel (%p285) target = $region71
        $region70: #{tpu_custom_call.1} parent=66 // pred_region
          _
        $region71: #{tpu_custom_call.1} parent=66 // pred_fallthru
          _
        %s288 = sand.u32 %s31, 1
        %s289 = sand.u32 %s31, 1
        %s290 = smul.addr %s289, 64
        %s291 = scalar_lea.vmem [#allocation3], %s290
        %p292 = pneg %p44
        %p293 = pneg %p41
        %p294 = pneg %p65
        %p295 = pneg %p62
        %p296 = pneg %p86
        %p297 = pneg %p83
        %p298 = pneg %p107
        %p299 = pneg %p104
        %p300 = pneg %p128
        %p301 = pneg %p125
        %p302 = pneg %p149
        %p303 = pneg %p146
        %p304 = pneg %p170
        %p305 = pneg %p167
        %p306 = pneg %p196
        %p307 = pneg %p193
        %s308 = sand.u32 %s183, 1
        %s309 = scalar_lea.sflag [#allocation5], %s308
        %s310 = sand.u32 %s183, 1
        %s311 = smul.addr %s310, 2
        %s312 = scalar_lea.vmem [#allocation4], %s311
        %s313 = smul.u32 2, %s23
        %s314 = smul.u32 2, %s23
        %v315 = vld [vmem:[%s284] sm:$0xff]
        %v316 = vld [vmem:[%s284 + $0x8] sm:$0xff]
        %v317 = vld [vmem:[%s284 + $0x10] sm:$0xff]
        %v318 = vld [vmem:[%s284 + $0x18] sm:$0xff]
        %v319 = vld [vmem:[%s284 + $0x20] sm:$0xff]
        %v320 = vld [vmem:[%s284 + $0x28] sm:$0xff]
        %v321 = vld [vmem:[%s284 + $0x30] sm:$0xff]
        %v322 = vld [vmem:[%s284 + $0x38] sm:$0xff]
        %v323 = vld [vmem:[%s1] sm:$0xff]
        %v324 = vld [vmem:[%s1 + $0x8] sm:$0xff]
        %v325 = vld [vmem:[%s1 + $0x10] sm:$0xff]
        %v326 = vld [vmem:[%s1 + $0x18] sm:$0xff]
        %v327 = vld [vmem:[%s1 + $0x20] sm:$0xff]
        %v328 = vld [vmem:[%s1 + $0x28] sm:$0xff]
        %v329 = vld [vmem:[%s1 + $0x30] sm:$0xff]
        %v330 = vld [vmem:[%s1 + $0x38] sm:$0xff]
        %v331 = vld [vmem:[%s2] sm:$0xff]
        %v332 = vld [vmem:[%s2 + $0x8] sm:$0xff]
        %v333 = vld [vmem:[%s2 + $0x10] sm:$0xff]
        %v334 = vld [vmem:[%s2 + $0x18] sm:$0xff]
        %v335 = vld [vmem:[%s2 + $0x20] sm:$0xff]
        %v336 = vld [vmem:[%s2 + $0x28] sm:$0xff]
        %v337 = vld [vmem:[%s2 + $0x30] sm:$0xff]
        %v338 = vld [vmem:[%s2 + $0x38] sm:$0xff]
        %340 = vset.pattern.permute.xlu0 0
        %341 = vperm.xlu0 %340, %v331
        %v342 = vpop.permute.xlu0 %341
        %345 = vset.pattern.permute.xlu0 0
        %346 = vperm.xlu0 %345, %v332
        %v347 = vpop.permute.xlu0 %346
        %350 = vset.pattern.permute.xlu0 0
        %351 = vperm.xlu0 %350, %v333
        %v352 = vpop.permute.xlu0 %351
        %355 = vset.pattern.permute.xlu0 0
        %356 = vperm.xlu0 %355, %v334
        %v357 = vpop.permute.xlu0 %356
        %360 = vset.pattern.permute.xlu0 0
        %361 = vperm.xlu0 %360, %v335
        %v362 = vpop.permute.xlu0 %361
        %365 = vset.pattern.permute.xlu0 0
        %366 = vperm.xlu0 %365, %v336
        %v367 = vpop.permute.xlu0 %366
        %370 = vset.pattern.permute.xlu0 0
        %371 = vperm.xlu0 %370, %v337
        %v372 = vpop.permute.xlu0 %371
        %375 = vset.pattern.permute.xlu0 0
        %376 = vperm.xlu0 %375, %v338
        %v377 = vpop.permute.xlu0 %376
        %vm379 = vcmask 261120
        %v381 = vsel %vm379, %v323, 0
        %v384 = vsel %vm379, %v324, 0
        %v387 = vsel %vm379, %v325, 0
        %v390 = vsel %vm379, %v326, 0
        %v393 = vsel %vm379, %v327, 0
        %v396 = vsel %vm379, %v328, 0
        %v399 = vsel %vm379, %v329, 0
        %v402 = vsel %vm379, %v330, 0
        %404 = vmatprep.subr.mxu0 %v316
        %405 = vmatpush1.msra.mxu0 %v315
        %406 = vmatprep.subr.mxu0 %v318
        %407 = vmatpush1.msra.mxu0 %v317
        %408 = vmatprep.subr.mxu0 %v320
        %409 = vmatpush1.msra.mxu0 %v319
        %410 = vmatprep.subr.mxu0 %v322
        %411 = vmatpush1.msra.mxu0 %v321
        %412 = vmatprep.subr.mxu0 0.0
        %413 = vmatpush1.msra.mxu0 0.0
        %414 = vmatprep.subr.mxu0 0.0
        %415 = vmatpush1.msra.mxu0 0.0
        %416 = vmatprep.subr.mxu0 0.0
        %417 = vmatpush1.msra.mxu0 0.0
        %418 = vmatprep.subr.mxu0 0.0
        %419 = vmatpush1.msra.mxu0 0.0
        %420 = vmatprep.subr.mxu0 0.0
        %421 = vmatpush1.msra.mxu0 0.0
        %422 = vmatprep.subr.mxu0 0.0
        %423 = vmatpush1.msra.mxu0 0.0
        %424 = vmatprep.subr.mxu0 0.0
        %425 = vmatpush1.msra.mxu0 0.0
        %426 = vmatprep.subr.mxu0 0.0
        %427 = vmatpush1.msra.mxu0 0.0
        %428 = vmatprep.subr.mxu0 0.0
        %429 = vmatpush1.msra.mxu0 0.0
        %430 = vmatprep.subr.mxu0 0.0
        %431 = vmatpush1.msra.mxu0 0.0
        %432 = vmatprep.subr.mxu0 0.0
        %433 = vmatpush1.msra.mxu0 0.0
        %434 = vmatprep.subr.mxu0 0.0
        %435 = vmatpush1.msra.mxu0 0.0
        %436 = vmatprep.subr.mxu0 0.0
        %437 = vmatpush1.msra.mxu0 0.0
        %438 = vmatprep.subr.mxu0 0.0
        %439 = vmatpush1.msra.mxu0 0.0
        %440 = vmatprep.subr.mxu0 0.0
        %441 = vmatpush1.msra.mxu0 0.0
        %442 = vmatprep.subr.mxu0 0.0
        %443 = vmatpush1.msra.mxu0 0.0
        %444 = vmatprep.subr.mxu0 0.0
        %445 = vmatpush1.msra.mxu0 0.0
        %446 = vmatprep.subr.mxu0 0.0
        %447 = vmatpush1.msra.mxu0 0.0
        %448 = vmatprep.subr.mxu0 0.0
        %449 = vmatpush1.msra.mxu0 0.0
        %450 = vmatprep.subr.mxu0 0.0
        %451 = vmatpush1.msra.mxu0 0.0
        %452 = vmatprep.subr.mxu0 0.0
        %453 = vmatpush1.msra.mxu0 0.0
        %454 = vmatprep.subr.mxu0 0.0
        %455 = vmatpush1.msra.mxu0 0.0
        %456 = vmatprep.subr.mxu0 0.0
        %457 = vmatpush1.msra.mxu0 0.0
        %458 = vmatprep.subr.mxu0 0.0
        %459 = vmatpush1.msra.mxu0 0.0
        %460 = vmatprep.subr.mxu0 0.0
        %461 = vmatpush1.msra.mxu0 0.0
        %462 = vmatprep.subr.mxu0 0.0
        %463 = vmatpush1.msra.mxu0 0.0
        %464 = vmatprep.subr.mxu0 0.0
        %465 = vmatpush1.msra.mxu0 0.0
        %466 = vmatprep.subr.mxu0 0.0
        %467 = vmatpush1.msra.mxu0 0.0
        %468 = vmatprep.mubr.f32.mxu0 0.0
        %469 = vmatmul.mubr.f32.gmra.mrb[0].mxu0 %v381
        %v470 = vpop.f32.mrb[0].mxu0
        %v471 = vadd.f32 %v342, %v470
        %v472 = vpop.f32.mrb[0].mxu0
        %v473 = vadd.f32 %v342, %v472
        %474 = vmatprep.mubr.f32.mxu0 0.0
        %475 = vmatmul.mubr.f32.gmra.mrb[0].mxu0 %v384
        %v476 = vpop.f32.mrb[0].mxu0
        %v477 = vadd.f32 %v347, %v476
        %v478 = vpop.f32.mrb[0].mxu0
        %v479 = vadd.f32 %v347, %v478
        %480 = vmatprep.mubr.f32.mxu0 0.0
        %481 = vmatmul.mubr.f32.gmra.mrb[0].mxu0 %v387
        %v482 = vpop.f32.mrb[0].mxu0
        %v483 = vadd.f32 %v352, %v482
        %v484 = vpop.f32.mrb[0].mxu0
        %v485 = vadd.f32 %v352, %v484
        %486 = vmatprep.mubr.f32.mxu0 0.0
        %487 = vmatmul.mubr.f32.gmra.mrb[0].mxu0 %v390
        %v488 = vpop.f32.mrb[0].mxu0
        %v489 = vadd.f32 %v357, %v488
        %v490 = vpop.f32.mrb[0].mxu0
        %v491 = vadd.f32 %v357, %v490
        %492 = vmatprep.mubr.f32.mxu0 0.0
        %493 = vmatmul.mubr.f32.gmra.mrb[0].mxu0 %v393
        %v494 = vpop.f32.mrb[0].mxu0
        %v495 = vadd.f32 %v362, %v494
        %v496 = vpop.f32.mrb[0].mxu0
        %v497 = vadd.f32 %v362, %v496
        %498 = vmatprep.mubr.f32.mxu0 0.0
        %499 = vmatmul.mubr.f32.gmra.mrb[0].mxu0 %v396
        %v500 = vpop.f32.mrb[0].mxu0
        %v501 = vadd.f32 %v367, %v500
        %v502 = vpop.f32.mrb[0].mxu0
        %v503 = vadd.f32 %v367, %v502
        %504 = vmatprep.mubr.f32.mxu0 0.0
        %505 = vmatmul.mubr.f32.gmra.mrb[0].mxu0 %v399
        %v506 = vpop.f32.mrb[0].mxu0
        %v507 = vadd.f32 %v372, %v506
        %v508 = vpop.f32.mrb[0].mxu0
        %v509 = vadd.f32 %v372, %v508
        %510 = vmatprep.mubr.f32.mxu0 0.0
        %511 = vmatmul.mubr.f32.gmra.mrb[0].mxu0 %v402
        %v512 = vpop.f32.mrb[0].mxu0
        %v513 = vadd.f32 %v377, %v512
        %v514 = vpop.f32.mrb[0].mxu0
        %v515 = vadd.f32 %v377, %v514
        %516 = vdwg.mxu0
        %v517 = vmax.f32 %v471, 0.0
        %v518 = vmax.f32 %v473, 0.0
        %v519 = vmax.f32 %v477, 0.0
        %v520 = vmax.f32 %v479, 0.0
        %v521 = vmax.f32 %v483, 0.0
        %v522 = vmax.f32 %v485, 0.0
        %v523 = vmax.f32 %v489, 0.0
        %v524 = vmax.f32 %v491, 0.0
        %v525 = vmax.f32 %v495, 0.0
        %v526 = vmax.f32 %v497, 0.0
        %v527 = vmax.f32 %v501, 0.0
        %v528 = vmax.f32 %v503, 0.0
        %v529 = vmax.f32 %v507, 0.0
        %v530 = vmax.f32 %v509, 0.0
        %v531 = vmax.f32 %v513, 0.0
        %v532 = vmax.f32 %v515, 0.0
        %v533 = vld [vmem:[%s3] sm:$0xff]
        %v534 = vld [vmem:[%s3 + $0x8] sm:$0xff]
        %v535 = vld [vmem:[%s3 + $0x10] sm:$0xff]
        %v536 = vld [vmem:[%s3 + $0x18] sm:$0xff]
        %v537 = vld [vmem:[%s3 + $0x20] sm:$0xff]
        %v538 = vld [vmem:[%s3 + $0x28] sm:$0xff]
        %v539 = vld [vmem:[%s3 + $0x30] sm:$0xff]
        %v540 = vld [vmem:[%s3 + $0x38] sm:$0xff]
        %v541 = vld [vmem:[%s4] sm:$0xff]
        %v542 = vld [vmem:[%s4 + $0x8] sm:$0xff]
        %v543 = vld [vmem:[%s4 + $0x10] sm:$0xff]
        %v544 = vld [vmem:[%s4 + $0x18] sm:$0xff]
        %v545 = vld [vmem:[%s4 + $0x20] sm:$0xff]
        %v546 = vld [vmem:[%s4 + $0x28] sm:$0xff]
        %v547 = vld [vmem:[%s4 + $0x30] sm:$0xff]
        %v548 = vld [vmem:[%s4 + $0x38] sm:$0xff]
        %550 = vset.pattern.permute.xlu0 0
        %551 = vperm.xlu0 %550, %v541
        %v552 = vpop.permute.xlu0 %551
        %555 = vset.pattern.permute.xlu0 0
        %556 = vperm.xlu0 %555, %v542
        %v557 = vpop.permute.xlu0 %556
        %560 = vset.pattern.permute.xlu0 0
        %561 = vperm.xlu0 %560, %v543
        %v562 = vpop.permute.xlu0 %561
        %565 = vset.pattern.permute.xlu0 0
        %566 = vperm.xlu0 %565, %v544
        %v567 = vpop.permute.xlu0 %566
        %570 = vset.pattern.permute.xlu0 0
        %571 = vperm.xlu0 %570, %v545
        %v572 = vpop.permute.xlu0 %571
        %575 = vset.pattern.permute.xlu0 0
        %576 = vperm.xlu0 %575, %v546
        %v577 = vpop.permute.xlu0 %576
        %580 = vset.pattern.permute.xlu0 0
        %581 = vperm.xlu0 %580, %v547
        %v582 = vpop.permute.xlu0 %581
        %585 = vset.pattern.permute.xlu0 0
        %586 = vperm.xlu0 %585, %v548
        %v587 = vpop.permute.xlu0 %586
        %vm589 = vcmask 523264
        %v591 = vsel %vm589, %v533, 0
        %v594 = vsel %vm589, %v534, 0
        %v597 = vsel %vm589, %v535, 0
        %v600 = vsel %vm589, %v536, 0
        %v603 = vsel %vm589, %v537, 0
        %v606 = vsel %vm589, %v538, 0
        %v609 = vsel %vm589, %v539, 0
        %v612 = vsel %vm589, %v540, 0
        %614 = vmatprep.subr.mxu0 %v518
        %615 = vmatpush1.msra.mxu0 %v517
        %616 = vmatprep.subr.mxu0 %v520
        %617 = vmatpush1.msra.mxu0 %v519
        %618 = vmatprep.subr.mxu0 %v522
        %619 = vmatpush1.msra.mxu0 %v521
        %620 = vmatprep.subr.mxu0 %v524
        %621 = vmatpush1.msra.mxu0 %v523
        %622 = vmatprep.subr.mxu0 %v526
        %623 = vmatpush1.msra.mxu0 %v525
        %624 = vmatprep.subr.mxu0 %v528
        %625 = vmatpush1.msra.mxu0 %v527
        %626 = vmatprep.subr.mxu0 %v530
        %627 = vmatpush1.msra.mxu0 %v529
        %628 = vmatprep.subr.mxu0 %v532
        %629 = vmatpush1.msra.mxu0 %v531
        %630 = vmatprep.subr.mxu0 0.0
        %631 = vmatpush1.msra.mxu0 0.0
        %632 = vmatprep.subr.mxu0 0.0
        %633 = vmatpush1.msra.mxu0 0.0
        %634 = vmatprep.subr.mxu0 0.0
        %635 = vmatpush1.msra.mxu0 0.0
        %636 = vmatprep.subr.mxu0 0.0
        %637 = vmatpush1.msra.mxu0 0.0
        %638 = vmatprep.subr.mxu0 0.0
        %639 = vmatpush1.msra.mxu0 0.0
        %640 = vmatprep.subr.mxu0 0.0
        %641 = vmatpush1.msra.mxu0 0.0
        %642 = vmatprep.subr.mxu0 0.0
        %643 = vmatpush1.msra.mxu0 0.0
        %644 = vmatprep.subr.mxu0 0.0
        %645 = vmatpush1.msra.mxu0 0.0
        %646 = vmatprep.subr.mxu0 0.0
        %647 = vmatpush1.msra.mxu0 0.0
        %648 = vmatprep.subr.mxu0 0.0
        %649 = vmatpush1.msra.mxu0 0.0
        %650 = vmatprep.subr.mxu0 0.0
        %651 = vmatpush1.msra.mxu0 0.0
        %652 = vmatprep.subr.mxu0 0.0
        %653 = vmatpush1.msra.mxu0 0.0
        %654 = vmatprep.subr.mxu0 0.0
        %655 = vmatpush1.msra.mxu0 0.0
        %656 = vmatprep.subr.mxu0 0.0
        %657 = vmatpush1.msra.mxu0 0.0
        %658 = vmatprep.subr.mxu0 0.0
        %659 = vmatpush1.msra.mxu0 0.0
        %660 = vmatprep.subr.mxu0 0.0
        %661 = vmatpush1.msra.mxu0 0.0
        %662 = vmatprep.subr.mxu0 0.0
        %663 = vmatpush1.msra.mxu0 0.0
        %664 = vmatprep.subr.mxu0 0.0
        %665 = vmatpush1.msra.mxu0 0.0
        %666 = vmatprep.subr.mxu0 0.0
        %667 = vmatpush1.msra.mxu0 0.0
        %668 = vmatprep.subr.mxu0 0.0
        %669 = vmatpush1.msra.mxu0 0.0
        %670 = vmatprep.subr.mxu0 0.0
        %671 = vmatpush1.msra.mxu0 0.0
        %672 = vmatprep.subr.mxu0 0.0
        %673 = vmatpush1.msra.mxu0 0.0
        %674 = vmatprep.subr.mxu0 0.0
        %675 = vmatpush1.msra.mxu0 0.0
        %676 = vmatprep.subr.mxu0 0.0
        %677 = vmatpush1.msra.mxu0 0.0
        %678 = vmatprep.mubr.f32.mxu0 0.0
        %679 = vmatmul.mubr.f32.gmra.mrb[0].mxu0 %v591
        %v680 = vpop.f32.mrb[0].mxu0
        %v681 = vadd.f32 %v552, %v680
        %v682 = vpop.f32.mrb[0].mxu0
        %v683 = vadd.f32 %v552, %v682
        %684 = vmatprep.mubr.f32.mxu0 0.0
        %685 = vmatmul.mubr.f32.gmra.mrb[0].mxu0 %v594
        %v686 = vpop.f32.mrb[0].mxu0
        %v687 = vadd.f32 %v557, %v686
        %v688 = vpop.f32.mrb[0].mxu0
        %v689 = vadd.f32 %v557, %v688
        %690 = vmatprep.mubr.f32.mxu0 0.0
        %691 = vmatmul.mubr.f32.gmra.mrb[0].mxu0 %v597
        %v692 = vpop.f32.mrb[0].mxu0
        %v693 = vadd.f32 %v562, %v692
        %v694 = vpop.f32.mrb[0].mxu0
        %v695 = vadd.f32 %v562, %v694
        %696 = vmatprep.mubr.f32.mxu0 0.0
        %697 = vmatmul.mubr.f32.gmra.mrb[0].mxu0 %v600
        %v698 = vpop.f32.mrb[0].mxu0
        %v699 = vadd.f32 %v567, %v698
        %v700 = vpop.f32.mrb[0].mxu0
        %v701 = vadd.f32 %v567, %v700
        %702 = vmatprep.mubr.f32.mxu0 0.0
        %703 = vmatmul.mubr.f32.gmra.mrb[0].mxu0 %v603
        %v704 = vpop.f32.mrb[0].mxu0
        %v705 = vadd.f32 %v572, %v704
        %v706 = vpop.f32.mrb[0].mxu0
        %v707 = vadd.f32 %v572, %v706
        %708 = vmatprep.mubr.f32.mxu0 0.0
        %709 = vmatmul.mubr.f32.gmra.mrb[0].mxu0 %v606
        %v710 = vpop.f32.mrb[0].mxu0
        %v711 = vadd.f32 %v577, %v710
        %v712 = vpop.f32.mrb[0].mxu0
        %v713 = vadd.f32 %v577, %v712
        %714 = vmatprep.mubr.f32.mxu0 0.0
        %715 = vmatmul.mubr.f32.gmra.mrb[0].mxu0 %v609
        %v716 = vpop.f32.mrb[0].mxu0
        %v717 = vadd.f32 %v582, %v716
        %v718 = vpop.f32.mrb[0].mxu0
        %v719 = vadd.f32 %v582, %v718
        %720 = vmatprep.mubr.f32.mxu0 0.0
        %721 = vmatmul.mubr.f32.gmra.mrb[0].mxu0 %v612
        %v722 = vpop.f32.mrb[0].mxu0
        %v723 = vadd.f32 %v587, %v722
        %v724 = vpop.f32.mrb[0].mxu0
        %v725 = vadd.f32 %v587, %v724
        %726 = vdwg.mxu0
        %v727 = vmax.f32 %v681, 0.0
        %v728 = vmax.f32 %v683, 0.0
        %v729 = vmax.f32 %v687, 0.0
        %v730 = vmax.f32 %v689, 0.0
        %v731 = vmax.f32 %v693, 0.0
        %v732 = vmax.f32 %v695, 0.0
        %v733 = vmax.f32 %v699, 0.0
        %v734 = vmax.f32 %v701, 0.0
        %v735 = vmax.f32 %v705, 0.0
        %v736 = vmax.f32 %v707, 0.0
        %v737 = vmax.f32 %v711, 0.0
        %v738 = vmax.f32 %v713, 0.0
        %v739 = vmax.f32 %v717, 0.0
        %v740 = vmax.f32 %v719, 0.0
        %v741 = vmax.f32 %v723, 0.0
        %v742 = vmax.f32 %v725, 0.0
        %v743 = vld [vmem:[%s5] sm:$0xff]
        %v744 = vld [vmem:[%s5 + $0x8] sm:$0xff]
        %v745 = vld [vmem:[%s5 + $0x10] sm:$0xff]
        %v746 = vld [vmem:[%s5 + $0x18] sm:$0xff]
        %v747 = vld [vmem:[%s5 + $0x20] sm:$0xff]
        %v748 = vld [vmem:[%s5 + $0x28] sm:$0xff]
        %v749 = vld [vmem:[%s5 + $0x30] sm:$0xff]
        %v750 = vld [vmem:[%s5 + $0x38] sm:$0xff]
        %v751 = vld [vmem:[#allocation2] sm:$0x1]
        %753 = vset.pattern.permute.xlu0 0
        %754 = vperm.xlu0 %753, %v743
        %v755 = vpop.permute.xlu0 %754
        %758 = vset.pattern.permute.xlu0 0
        %759 = vperm.xlu0 %758, %v744
        %v760 = vpop.permute.xlu0 %759
        %763 = vset.pattern.permute.xlu0 0
        %764 = vperm.xlu0 %763, %v745
        %v765 = vpop.permute.xlu0 %764
        %768 = vset.pattern.permute.xlu0 0
        %769 = vperm.xlu0 %768, %v746
        %v770 = vpop.permute.xlu0 %769
        %773 = vset.pattern.permute.xlu0 0
        %774 = vperm.xlu0 %773, %v747
        %v775 = vpop.permute.xlu0 %774
        %778 = vset.pattern.permute.xlu0 0
        %779 = vperm.xlu0 %778, %v748
        %v780 = vpop.permute.xlu0 %779
        %783 = vset.pattern.permute.xlu0 0
        %784 = vperm.xlu0 %783, %v749
        %v785 = vpop.permute.xlu0 %784
        %788 = vset.pattern.permute.xlu0 0
        %789 = vperm.xlu0 %788, %v750
        %v790 = vpop.permute.xlu0 %789
        %v792 = vmul.f32 %v727, %v755
        %v793 = vmul.f32 %v728, %v755
        %v794 = vmul.f32 %v729, %v760
        %v795 = vmul.f32 %v730, %v760
        %v796 = vmul.f32 %v731, %v765
        %v797 = vmul.f32 %v732, %v765
        %v798 = vmul.f32 %v733, %v770
        %v799 = vmul.f32 %v734, %v770
        %v800 = vmul.f32 %v735, %v775
        %v801 = vmul.f32 %v736, %v775
        %v802 = vmul.f32 %v737, %v780
        %v803 = vmul.f32 %v738, %v780
        %v804 = vmul.f32 %v739, %v785
        %v805 = vmul.f32 %v740, %v785
        %v806 = vmul.f32 %v741, %v790
        %v807 = vmul.f32 %v742, %v790
        %v808 = vadd.f32 %v792, %v794
        %v809 = vadd.f32 %v808, %v796
        %v810 = vadd.f32 %v809, %v798
        %v811 = vadd.f32 %v810, %v800
        %v812 = vadd.f32 %v811, %v802
        %v813 = vadd.f32 %v812, %v804
        %v814 = vadd.f32 %v813, %v806
        %v815 = vrot.slane %v814, 4
        %v816 = vadd.f32 %v814, %v815
        %v817 = vrot.slane %v816, 2
        %v818 = vadd.f32 %v816, %v817
        %v819 = vrot.slane %v818, 1
        %v820 = vadd.f32 %v818, %v819
        %v821 = vadd.f32 %v793, %v795
        %v822 = vadd.f32 %v821, %v797
        %v823 = vadd.f32 %v822, %v799
        %v824 = vadd.f32 %v823, %v801
        %v825 = vadd.f32 %v824, %v803
        %v826 = vadd.f32 %v825, %v805
        %v827 = vadd.f32 %v826, %v807
        %v828 = vrot.slane %v827, 4
        %v829 = vadd.f32 %v827, %v828
        %v830 = vrot.slane %v829, 2
        %v831 = vadd.f32 %v829, %v830
        %v832 = vrot.slane %v831, 1
        %v833 = vadd.f32 %v831, %v832
        %835 = vset.pattern.permute.xlu0 0
        %836 = vperm.xlu0 %835, %v751
        %v837 = vpop.permute.xlu0 %836
        %v839 = vlaneseq
        %v840 = vshrl.u32 %v839, 7
        %v841 = vsub.s32 0, %v840
        %v842 = vrot.slane %v837, %v841
        %v843 = vadd.f32 %v820, %v842
        %v844 = vadd.f32 %v833, %v842
        %v847 = vcombine.low %v843, %v844
        %v849 = vunpack.c.l.s4 1966171168
        %v850 = vunpack.c.0.s8 %v849
        %v851 = vlaneseq
        %v852 = vshrl.u32 %v851, 7
        %v853 = vsub.s32 %v850, %v852
        %v854 = vrot.slane %v847, %v853
        %v856 = vunpack.c.l.s4 1966171168
        %v857 = vunpack.c.0.s8 %v856
        %v858 = vlaneseq
        %v859 = vshrl.u32 %v858, 7
        %v860 = vsub.s32 %v857, %v859
        %v861 = vrot.slane %v854, %v860
        %v863 = vlaneseq
        %vm864 = vcmp.ge.s32.totalorder %v863, 0
        %vm865 = vcmp.lt.s32.totalorder %v863, 256
        %vm866 = vmand %vm864, %vm865
        %867 = vst.msk [vmem:[%s312] sm:$0x3] %vm866, %v861
        %s868 = sand.u32 %s183, 1
        %s869 = scalar_lea.sflag [#allocation5], %s868
        %s870 = sand.u32 %s183, 1
        %s871 = smul.addr %s870, 2
        %s872 = scalar_lea.vmem [#allocation4], %s871
        // Predicated region
        $region72: #{tpu_custom_call.1} parent=66 // pred_check
          %p873 = pneg %p193
        $region73: #{tpu_custom_call.1} parent=66 // pred_check_branch
          %875 = sbr.rel (%p873) target = $region75
        $region74: #{tpu_custom_call.1} parent=66 // pred_region
          %s876 = smul.u32 2, %s23
          %s878 = ssub.s32 32, 32
          %879 = vsyncadd %s869, %s878
          %s880 = smul.addr %s876, 16
          %s881 = scalar_lea.hbm %s7, %s880
          %s883 = sshll.u32 %s872, 4
          %s884 = int_to_ptr.vmem [resolvable:$true] %s883
          %886 = dma.vmem_to_hbm [thread:$0]  %s884, 32, %s881, %s869
        $region75: #{tpu_custom_call.1} parent=66 // pred_fallthru
          _
      $region67: #{tpu_custom_call.1} parent=5 // pred_fallthru
        _
      %p887 = scmp.le.s32.totalorder 2, %s18
      // Predicated region
      $region76: #{tpu_custom_call.1} parent=5 // pred_check
        %p888 = pneg %p887
      $region77: #{tpu_custom_call.1} parent=5 // pred_check_branch
        %890 = sbr.rel (%p888) target = $region79
      $region78: #{tpu_custom_call.1} parent=5 // pred_region
        %s891 = ssub.s32 %s18, 2
        // Predicated region
        $region80: #{tpu_custom_call.1} parent=78 // pred_check
          %p892 = pneg %p199
        $region81: #{tpu_custom_call.1} parent=78 // pred_check_branch
          %894 = sbr.rel (%p892) target = $region83
        $region82: #{tpu_custom_call.1} parent=78 // pred_region
          %s895 = sand.u32 %s184, 1
          %s896 = scalar_lea.sflag [#allocation5], %s895
          %s897 = sand.u32 %s184, 1
          %s898 = smul.addr %s897, 2
          %s899 = scalar_lea.vmem [#allocation4], %s898
          %900 = dma.done %s896, 32
        $region83: #{tpu_custom_call.1} parent=78 // pred_fallthru
          _
      $region79: #{tpu_custom_call.1} parent=5 // pred_fallthru
        _
    $region6: #{tpu_custom_call.1} parent=1 // loop_footer
      %s22 = sadd.s32 1, %s18
    $region7: #{tpu_custom_call.1} parent=1 // loop_footer_branch
      %17 = sbr.rel target = $region3
    $region8: #{tpu_custom_call.1} parent=1 // loop_exit
      _
    %901 = vsyncpa [#allocation5], 1
    %s902 = scalar_lea.sflag [#allocation5], 1
    %903 = vsyncpa %s902, 1

</llo_original>
